<compile_context>
chip_gen: v5e
topology: v5e:2x2
jax: 0.10.0
libtpu: 0.0.40
codegen_flags: <defaults>
</compile_context>

<pallas_src>
import functools

import jax
import jax.numpy as jnp
from jax.experimental import pallas as pl
from jax.experimental.pallas import tpu as pltpu


def _round_up(x, m):
    return (x + m - 1) // m * m


def _patch_embed_kernel(patches_ref, w_ref, pos_ref, out_ref):
    # patches_ref: (TM, Kp) bf16   w_ref: (Kp, E) bf16
    # pos_ref:     (TM, E)  f32    out_ref: (TM, E) f32
    acc = jnp.dot(patches_ref[...], w_ref[...],
                  preferred_element_type=jnp.float32)       # MXU, f32 accumulate
    out_ref[...] = (acc + pos_ref[...]).astype(out_ref.dtype)  # one aligned store


def visual_encoder_forward(x, conv_w, conv_b, cls_token, positions, patch_size,
                           target_block_rows=256):
    """x: (b, c, H, W) NCHW.  conv_w: (E, C, p, p).  conv_b: (E,).
    cls_token: (1, 1, E).  positions: (S, E), S = (H//p)*(W//p) + 1.
    Returns (b, S, E) float32 (== cat([cls, conv_patches], 1) + positions)."""
    b, c, H, W = x.shape
    p = patch_size
    hp, wp = H // p, W // p
    num_patches = hp * wp
    E = conv_w.shape[0]
    K = c * p * p

    # --- glue: extract non-overlapping patches, flattened as (C, kH, kW) to
    # match the Conv2d weight layout.  Cast to bf16 first so the materialized
    # intermediate (and its DMA into the kernel) is half-size.
    # TODO(synk): fuse patch extraction into the kernel (tile x directly) to
    # avoid the extra HBM round trip of this intermediate.
    xb = x.astype(jnp.bfloat16)
    patches = xb.reshape(b, c, hp, p, wp, p)
    patches = patches.transpose(0, 2, 4, 1, 3, 5)            # (b, hp, wp, c, p, p)
    patches = patches.reshape(b, num_patches, K)

    # --- alignment padding: K -> multiple of 128 (lanes / MXU depth),
    # per-image rows -> multiple of 8 (sublanes).
    Kp = _round_up(max(K, 128), 128)
    np_pad = _round_up(num_patches, 8)
    patches = jnp.pad(patches,
                      ((0, 0), (0, np_pad - num_patches), (0, Kp - K)))
    patches2d = patches.reshape(b * np_pad, Kp)               # (M, Kp) bf16

    w_mat = conv_w.reshape(E, K).T.astype(jnp.bfloat16)       # (K, E)
    w_mat = jnp.pad(w_mat, ((0, Kp - K), (0, 0)))             # (Kp, E)

    # --- fold conv bias into the per-patch positional rows (f32 epilogue add).
    pos_patch = (positions[1:, :] + conv_b[None, :]).astype(jnp.float32)
    pos_patch = jnp.pad(pos_patch, ((0, np_pad - num_patches), (0, 0)))

    # --- row tiling over folded M = b * np_pad.  The per-row positional
    # embedding is periodic with period np_pad, so either pack a whole number
    # of images per tile, or pick a tile dividing np_pad and address the
    # positions block with a modular index_map.
    M = b * np_pad
    if np_pad <= target_block_rows:
        imgs_per_tile = max(d for d in range(1, b + 1)
                            if b % d == 0 and d * np_pad <= target_block_rows)
        tm = imgs_per_tile * np_pad
        pos_rows = jnp.tile(pos_patch, (imgs_per_tile, 1))    # (tm, E)
    else:
        tm = max(d for d in range(8, target_block_rows + 1, 8)
                 if np_pad % d == 0)
        pos_rows = pos_patch                                  # (np_pad, E)
    pos_period = pos_rows.shape[0] // tm                      # blocks per period
    num_row_tiles = M // tm

    out2d = pl.pallas_call(
        _patch_embed_kernel,
        out_shape=jax.ShapeDtypeStruct((M, E), jnp.float32),
        grid_spec=pltpu.PrefetchScalarGridSpec(
            num_scalar_prefetch=0,
            grid=(num_row_tiles,),
            in_specs=[
                pl.BlockSpec((tm, Kp), lambda i: (i, 0)),
                pl.BlockSpec((Kp, E), lambda i: (0, 0)),
                pl.BlockSpec((tm, E), lambda i: (i % pos_period, 0)),
            ],
            out_specs=pl.BlockSpec((tm, E), lambda i: (i, 0)),
        ),
        compiler_params=pltpu.CompilerParams(
            dimension_semantics=("parallel",),
            vmem_limit_bytes=32 * 1024 * 1024),
    )(patches2d, w_mat, pos_rows)

    # --- wrapper epilogue: drop row padding, prepend cls + positions[0].
    out_patches = out2d.reshape(b, np_pad, E)[:, :num_patches, :]
    cls_row = (cls_token.reshape(1, E) + positions[0:1, :]).astype(out_patches.dtype)
    cls_rows = jnp.broadcast_to(cls_row[None, :, :], (b, 1, E))
    return jnp.concatenate([cls_rows, out_patches], axis=1)   # (b, S, E)


def _reference(x, conv_w, conv_b, cls_token, positions, patch_size):
    # Pure-JAX reference with the same bf16 input rounding as the kernel.
    b, c, H, W = x.shape
    p = patch_size
    hp, wp = H // p, W // p
    E = conv_w.shape[0]
    K = c * p * p
    patches = x.astype(jnp.bfloat16).astype(jnp.float32)
    patches = patches.reshape(b, c, hp, p, wp, p).transpose(0, 2, 4, 1, 3, 5)
    patches = patches.reshape(b, hp * wp, K)
    w = conv_w.reshape(E, K).T.astype(jnp.bfloat16).astype(jnp.float32)
    emb = jnp.einsum("bnk,ke->bne", patches, w,
                     preferred_element_type=jnp.float32) + conv_b[None, None, :]
    cls = jnp.broadcast_to(cls_token, (b, 1, E)).astype(jnp.float32)
    out = jnp.concatenate([cls, emb], axis=1)
    return out + positions[None, :, :]


if __name__ == "__main__":
    # Small shapes consistent with the module's forward pass.
    batch = 2
    in_channel = 3
    patch_size = 4
    img_size = 16
    emb_size = 128
    num_patches = (img_size // patch_size) ** 2
    seq = num_patches + 1

    key = jax.random.PRNGKey(0)
    k_x, k_w, k_b, k_cls, k_pos = jax.random.split(key, 5)

    x = jax.random.normal(k_x, (batch, in_channel, img_size, img_size),
                          dtype=jnp.float32)
    conv_w = jax.random.normal(
        k_w, (emb_size, in_channel, patch_size, patch_size),
        dtype=jnp.float32) * 0.02
    conv_b = jax.random.normal(k_b, (emb_size,), dtype=jnp.float32) * 0.02
    cls_token = jax.random.normal(k_cls, (1, 1, emb_size), dtype=jnp.float32)
    positions = jax.random.normal(k_pos, (seq, emb_size), dtype=jnp.float32)

    fwd = jax.jit(functools.partial(visual_encoder_forward,
                                    patch_size=patch_size))
    out = jax.block_until_ready(fwd(x, conv_w, conv_b, cls_token, positions))

    ref = _reference(x, conv_w, conv_b, cls_token, positions, patch_size)
    assert out.shape == (batch, seq, emb_size)
    assert jnp.allclose(out, ref, atol=1e-3, rtol=1e-3), "mismatch vs reference"

    print("KERNEL_OK")
</pallas_src>

<mosaic_0001>
module attributes {stable_mosaic.version = 11 : i64} {
  func.func @_patch_embed_kernel(%arg0: i32, %arg1: memref<32x128xbf16, #tpu.memory_space<vmem>>, %arg2: memref<128x128xbf16, #tpu.memory_space<vmem>>, %arg3: memref<32x128xf32, #tpu.memory_space<vmem>>, %arg4: memref<32x128xf32, #tpu.memory_space<vmem>>) attributes {dimension_semantics = [#tpu.dimension_semantics<parallel>], iteration_bounds = array<i64: 1>, scalar_prefetch = 0 : i64, scratch_operands = 0 : i64, tpu.core_type = #tpu.core_type<tc>, window_params = [{transform_indices = @transform_0, window_bounds = array<i64: 32, 128>}, {pipeline_mode = #tpu.pipeline_mode<synchronous>, transform_indices = @transform_1, window_bounds = array<i64: 128, 128>}, {transform_indices = @transform_2, window_bounds = array<i64: 32, 128>}, {transform_indices = @transform_3, window_bounds = array<i64: 32, 128>}]} {
    %c0 = arith.constant 0 : index
    %c0_0 = arith.constant 0 : index
    %0 = vector.load %arg1[%c0, %c0_0] : memref<32x128xbf16, #tpu.memory_space<vmem>>, vector<32x128xbf16>
    %c0_1 = arith.constant 0 : index
    %c0_2 = arith.constant 0 : index
    %1 = vector.load %arg2[%c0_1, %c0_2] : memref<128x128xbf16, #tpu.memory_space<vmem>>, vector<128x128xbf16>
    %cst = arith.constant dense<0.000000e+00> : vector<32x128xf32>
    %2 = tpu.matmul %0, %1, %cst {dimension_numbers = #tpu.dot_dimension_numbers<[1], [0], [0], [1], [0, 0, 1, 1], [], []>} : vector<32x128xbf16>, vector<128x128xbf16>, vector<32x128xf32> -> vector<32x128xf32>
    %c0_3 = arith.constant 0 : index
    %c0_4 = arith.constant 0 : index
    %3 = vector.load %arg3[%c0_3, %c0_4] : memref<32x128xf32, #tpu.memory_space<vmem>>, vector<32x128xf32>
    %4 = arith.addf %2, %3 : vector<32x128xf32>
    %c0_5 = arith.constant 0 : index
    %c0_6 = arith.constant 0 : index
    %5 = vector.load %arg4[%c0_5, %c0_6] : memref<32x128xf32, #tpu.memory_space<vmem>>, vector<32x128xf32>
    tpu.vector_store %arg4[%c0_5, %c0_6], %4 {strides = array<i32>} : memref<32x128xf32, #tpu.memory_space<vmem>>, vector<32x128xf32>,
    return
  }
  func.func @transform_0(%arg0: i32) -> (i32, i32) {
    %c0_i32 = arith.constant 0 : i32
    %c0_i32_0 = arith.constant 0 : i32
    return %arg0, %c0_i32 : i32, i32
  }
  func.func @transform_1(%arg0: i32) -> (i32, i32) {
    %c0_i32 = arith.constant 0 : i32
    %c0_i32_0 = arith.constant 0 : i32
    %c0_i32_1 = arith.constant 0 : i32
    return %c0_i32, %c0_i32_0 : i32, i32
  }
  func.func @transform_2(%arg0: i32) -> (i32, i32) {
    %c1_i32 = arith.constant 1 : i32
    %c0_i32 = arith.constant 0 : i32
    %0 = arith.cmpi eq, %c1_i32, %c0_i32 : i32
    %c1_i32_0 = arith.constant 1 : i32
    %1 = arith.select %0, %c1_i32_0, %c1_i32 : i32
    %2 = arith.remsi %arg0, %1 : i32
    %c0_i32_1 = arith.constant 0 : i32
    %3 = arith.cmpi ne, %2, %c0_i32_1 : i32
    %c0_i32_2 = arith.constant 0 : i32
    %4 = arith.cmpi slt, %2, %c0_i32_2 : i32
    %c0_i32_3 = arith.constant 0 : i32
    %5 = arith.cmpi slt, %1, %c0_i32_3 : i32
    %6 = arith.xori %4, %5 : i1
    %7 = arith.andi %6, %3 : i1
    %8 = arith.addi %2, %1 : i32
    %9 = arith.select %7, %8, %2 : i32
    %c0_i32_4 = arith.constant 0 : i32
    %c0_i32_5 = arith.constant 0 : i32
    return %9, %c0_i32_4 : i32, i32
  }
  func.func @transform_3(%arg0: i32) -> (i32, i32) {
    %c0_i32 = arith.constant 0 : i32
    %c0_i32_0 = arith.constant 0 : i32
    return %arg0, %c0_i32 : i32, i32
  }
}

</mosaic_0001>

<llo_original>
// kernel: visual_encoder_forward.1
$region0: #{visual_encoder_forward.1}
  #allocation0 [shape = 'u32[]', space=smem, size = 0x4, offset = 0x4, fixed_abs, tag = 'smem constant byte address 0x4 - core index']
  #allocation1 [shape = 'u32[72,128]{1,0:T(1,128)}', space=vmem, size = 0x9000, scoped, tag = 'internal scratch']
  %s0 = inlined_call_operand.vmem [shape: bf16[32,128], index: 0, kind: input, shape index: {}]
  %s1 = inlined_call_operand.vmem [shape: bf16[128,128], index: 1, kind: input, shape index: {}]
  %s2 = inlined_call_operand.vmem [shape: f32[32,128], index: 2, kind: input, shape index: {}]
  %s3 = inlined_call_operand.vmem [shape: f32[32,128], index: 3, kind: output, shape index: {}]
  %s4 = sld [smem:[#allocation0]]
  $region22: #{visual_encoder_forward.1} parent=0
    _
  %s6 = ssub.s32 1, %s4
  %s7 = scalar_select 0, %s6, %s4
  // Predicated region
  $region2: #{visual_encoder_forward.1} parent=0 // pred_check
    _
  $region3: #{visual_encoder_forward.1} parent=0 // pred_check_branch
    %9 = sbr.rel (0) target = $region5
  $region4: #{visual_encoder_forward.1} parent=0 // pred_region
    _
  $region5: #{visual_encoder_forward.1} parent=0 // pred_fallthru
    _
  // Predicated region
  $region6: #{visual_encoder_forward.1} parent=0 // pred_check
    _
  $region7: #{visual_encoder_forward.1} parent=0 // pred_check_branch
    %11 = sbr.rel (0) target = $region9
  $region8: #{visual_encoder_forward.1} parent=0 // pred_region
    _
  $region9: #{visual_encoder_forward.1} parent=0 // pred_fallthru
    _
  // Predicated region
  $region10: #{visual_encoder_forward.1} parent=0 // pred_check
    _
  $region11: #{visual_encoder_forward.1} parent=0 // pred_check_branch
    %13 = sbr.rel (0) target = $region13
  $region12: #{visual_encoder_forward.1} parent=0 // pred_region
    _
  $region13: #{visual_encoder_forward.1} parent=0 // pred_fallthru
    _
  %v14 = vld [vmem:[%s0] sm:$0xf]
  %v15 = vld [vmem:[%s0 + $0x4] sm:$0xf]
  %v16 = vld [vmem:[%s0 + $0x8] sm:$0xf]
  %v17 = vld [vmem:[%s0 + $0xc] sm:$0xf]
  %v18 = vld [vmem:[%s1] sm:$0xf]
  %v19 = vld [vmem:[%s1 + $0x4] sm:$0xf]
  %v20 = vld [vmem:[%s1 + $0x8] sm:$0xf]
  %v21 = vld [vmem:[%s1 + $0xc] sm:$0xf]
  %v22 = vld [vmem:[%s1 + $0x10] sm:$0xf]
  %v23 = vld [vmem:[%s1 + $0x14] sm:$0xf]
  %v24 = vld [vmem:[%s1 + $0x18] sm:$0xf]
  %v25 = vld [vmem:[%s1 + $0x1c] sm:$0xf]
  %v26 = vld [vmem:[%s1 + $0x20] sm:$0xf]
  %v27 = vld [vmem:[%s1 + $0x24] sm:$0xf]
  %v28 = vld [vmem:[%s1 + $0x28] sm:$0xf]
  %v29 = vld [vmem:[%s1 + $0x2c] sm:$0xf]
  %v30 = vld [vmem:[%s1 + $0x30] sm:$0xf]
  %v31 = vld [vmem:[%s1 + $0x34] sm:$0xf]
  %v32 = vld [vmem:[%s1 + $0x38] sm:$0xf]
  %v33 = vld [vmem:[%s1 + $0x3c] sm:$0xf]
  %v34 = vld [vmem:[%s2] sm:$0xff]
  %v35 = vld [vmem:[%s2 + $0x8] sm:$0xff]
  %v36 = vld [vmem:[%s2 + $0x10] sm:$0xff]
  %v37 = vld [vmem:[%s2 + $0x18] sm:$0xff]
  %v42 = vunpack.c.l.b16 %v14
  %v43 = vunpack.c.l.b16 %v15
  %v44 = vunpack.c.l.b16 %v16
  %v45 = vunpack.c.l.b16 %v17
  %v46 = vpack.c.b16 %v43, %v42
  %v47 = vpack.c.b16 %v45, %v44
  %v66 = vunpack.c.l.b16 %v18
  %v67 = vunpack.c.l.b16 %v19
  %v68 = vunpack.c.l.b16 %v20
  %v69 = vunpack.c.l.b16 %v21
  %v70 = vunpack.c.l.b16 %v22
  %v71 = vunpack.c.l.b16 %v23
  %v72 = vunpack.c.l.b16 %v24
  %v73 = vunpack.c.l.b16 %v25
  %v74 = vunpack.c.l.b16 %v26
  %v75 = vunpack.c.l.b16 %v27
  %v76 = vunpack.c.l.b16 %v28
  %v77 = vunpack.c.l.b16 %v29
  %v78 = vunpack.c.l.b16 %v30
  %v79 = vunpack.c.l.b16 %v31
  %v80 = vunpack.c.l.b16 %v32
  %v81 = vunpack.c.l.b16 %v33
  %v82 = vpack.c.b16 %v67, %v66
  %v83 = vpack.c.b16 %v69, %v68
  %v84 = vpack.c.b16 %v71, %v70
  %v85 = vpack.c.b16 %v73, %v72
  %v86 = vpack.c.b16 %v75, %v74
  %v87 = vpack.c.b16 %v77, %v76
  %v88 = vpack.c.b16 %v79, %v78
  %v89 = vpack.c.b16 %v81, %v80
  %98 = vmatpush.bf16.msra.mxu0 %v89
  %99 = vmatpush.bf16.msra.mxu0 %v88
  %100 = vmatpush.bf16.msra.mxu0 %v87
  %101 = vmatpush.bf16.msra.mxu0 %v86
  %102 = vmatpush.bf16.msra.mxu0 %v85
  %103 = vmatpush.bf16.msra.mxu0 %v84
  %104 = vmatpush.bf16.msra.mxu0 %v83
  %105 = vmatpush.bf16.msra.mxu0 %v82
  %106 = vmatmul.bf16.gmra.mxu0 %v46
  %v107 = vpop.f32.mrf.mxu0
  %v108 = vadd.f32 %v34, %v107
  %v109 = vpop.f32.mrf.mxu0
  %v110 = vadd.f32 %v35, %v109
  %111 = vmatmul.bf16.gmra.mxu0 %v47
  %v112 = vpop.f32.mrf.mxu0
  %v113 = vadd.f32 %v36, %v112
  %v114 = vpop.f32.mrf.mxu0
  %v115 = vadd.f32 %v37, %v114
  %116 = vdwg.mxu0
  %117 = vst [vmem:[%s3] sm:$0xff] %v108
  %118 = vst [vmem:[%s3 + $0x8] sm:$0xff] %v110
  %119 = vst [vmem:[%s3 + $0x10] sm:$0xff] %v113
  %120 = vst [vmem:[%s3 + $0x18] sm:$0xff] %v115
  // Predicated region
  $region14: #{visual_encoder_forward.1} parent=0 // pred_check
    _
  $region15: #{visual_encoder_forward.1} parent=0 // pred_check_branch
    %122 = sbr.rel (0) target = $region17
  $region16: #{visual_encoder_forward.1} parent=0 // pred_region
    _
  $region17: #{visual_encoder_forward.1} parent=0 // pred_fallthru
    _
  // Predicated region
  $region18: #{visual_encoder_forward.1} parent=0 // pred_check
    _
  $region19: #{visual_encoder_forward.1} parent=0 // pred_check_branch
    %124 = sbr.rel (0) target = $region21
  $region20: #{visual_encoder_forward.1} parent=0 // pred_region
    _
  $region21: #{visual_encoder_forward.1} parent=0 // pred_fallthru
    _

</llo_original>
